<compile_context>
chip_gen: v6e
topology: v6e:2x2x1
jax: 0.10.0
libtpu: 0.0.40
codegen_flags: <defaults>
</compile_context>

<pallas_src>
import functools

import jax
import jax.numpy as jnp
from jax.experimental import pallas as pl
from jax.experimental.pallas import tpu as pltpu


# ----------------------------------------------------------------------------
# Kernel: out[b] = adj[b] @ slab[b]  (+ bias on the last contraction step).
# ----------------------------------------------------------------------------
def _agg_kernel(*refs, add_bias):
    if add_bias:
        x_ref, adj_ref, b_ref, out_ref = refs
    else:
        x_ref, adj_ref, out_ref = refs
        b_ref = None

    k = pl.program_id(2)
    nk = pl.num_programs(2)

    # bf16 (or f32) operands, f32 accumulation on the MXU.
    part = jnp.dot(adj_ref[0], x_ref[0], preferred_element_type=jnp.float32)

    @pl.when(k == 0)
    def _first():
        out_ref[0] = part

    @pl.when(k > 0)
    def _accumulate():
        out_ref[0] += part

    if add_bias:
        @pl.when(k == nk - 1)
        def _bias():
            out_ref[0] += b_ref[...]


# ----------------------------------------------------------------------------
# Tiling helpers (VMEM-budget aware).
# ----------------------------------------------------------------------------
def _round_up(v, m):
    return -(-v // m) * m


def _divisors(n):
    out = set()
    i = 1
    while i * i <= n:
        if n % i == 0:
            out.add(i)
            out.add(n // i)
        i += 1
    return sorted(out)


def _vmem_limit_bytes():
    try:
        cap = int(pltpu.get_tpu_info().vmem_capacity_bytes)
    except Exception:
        cap = 64 * 1024 * 1024  # conservative: v7x per-TC physical VMEM
    # ~96 MiB scoped limit on 128 MiB chips (v5e/v6e), ~48 MiB on v7x.
    return min(100 * 1024 * 1024, int(cap * 0.75))


def _ws_bytes(tr, tk, cp, xb, ab, adj_bufs):
    return (2 * tk * cp * xb            # slab tile (double buffered)
            + adj_bufs * tr * tk * ab   # adjacency tile
            + 2 * tr * cp * 4           # f32 output tile (double buffered)
            + 2 * cp * 4)               # bias row


def _plan_tiles(n, b, cp, xb, ab, budget, sub, row_tile, k_tile):
    """Return (Np, tr, tk): padded node count, row tile, contraction tile."""
    if row_tile is not None or k_tile is not None:
        tk = k_tile if k_tile is not None else n
        tr = row_tile if row_tile is not None else min(n, 256)
        assert n % tr == 0 and n % tk == 0, (n, tr, tk)
        assert tr % sub == 0 or tr == n, tr
        assert tk % 128 == 0 or tk == n, tk
        return n, tr, tk

    # Path 1: tk == N  ->  slab is DMA'd exactly once per batch (no restream).
    np_ = _round_up(n, sub)
    tk = np_
    cands = sorted({d for d in _divisors(np_)
                    if (d % sub == 0 or d == np_) and d <= 512}, reverse=True)
    if not cands:
        cands = [np_]
    if b == 1:  # make sure both v7x TensorCores get row tiles
        split = [t for t in cands if np_ // t >= 2]
        cands = split + [t for t in cands if t not in split]
    for tr in cands:
        if _ws_bytes(tr, tk, cp, xb, ab, 2) <= budget:
            return np_, tr, tk

    # Path 2: tile the contraction too (128-aligned k tiles; pad N to 128).
    np_ = _round_up(n, 128)
    divs = _divisors(np_)
    tk_cands = sorted([d for d in divs if d % 128 == 0 and d <= 2048], reverse=True)
    tr_cands = sorted([d for d in divs if d % sub == 0 and d <= 512], reverse=True)
    for tr in tr_cands:        # prefer big row tiles first (fewer x re-streams)
        for tk in tk_cands:
            if _ws_bytes(tr, tk, cp, xb, ab, 2) <= budget:
                return np_, tr, tk
    return np_, max(sub, 8), 128


# ----------------------------------------------------------------------------
# Wrapper.
# ----------------------------------------------------------------------------
def dense_graph_conv(x, adj, weight, bias=None, *, compute_dtype=jnp.bfloat16,
                     row_tile=None, k_tile=None):
    """X' = adj @ (x @ W) + b  (PyTorch DenseGraphConv forward).

    x: (B, S, N, F_in); adj: (B, N, N); weight: (F_in, F_out) — transpose of
    torch's nn.Linear.weight; bias: (F_out,) or None.
    compute_dtype: dtype fed to the MXU for the aggregation matmul
    (accumulation is always f32).  Default bf16; use jnp.float32 for exact f32.
    Returns (B, N, S, F_out) in x.dtype.
    """
    B, S, N, F_in = x.shape
    F_out = weight.shape[-1]
    out_dtype = x.dtype
    if compute_dtype is None:
        compute_dtype = x.dtype

    # Hoist the small dense linear to XLA (review: removes in-kernel
    # lane->sublane reshapes and K<128 MXU matmuls).
    pre_apply = F_out <= F_in
    if pre_apply:
        feat = jnp.einsum("bsnf,fo->bsno", x, weight)   # module order
        C = S * F_out
    else:
        feat = x                                        # apply W after the kernel
        C = S * F_in

    # 'b s n f -> b n (s f)' lane-dense slab; pad lanes to a multiple of 128.
    slab = jnp.transpose(feat, (0, 2, 1, 3)).reshape(B, N, C)
    Cp = _round_up(C, 128)

    xb = jnp.dtype(compute_dtype).itemsize
    ab = xb
    sub = 8 if xb >= 4 else 16          # sublane alignment for packed dtypes
    vmem_limit = _vmem_limit_bytes()
    budget = int(vmem_limit * 0.8)      # headroom for Mosaic internal scratch
    Np, tr, tk = _plan_tiles(N, B, Cp, xb, ab, budget, sub, row_tile, k_tile)

    slab = jnp.pad(slab, ((0, 0), (0, Np - N), (0, Cp - C))).astype(compute_dtype)
    adj_c = jnp.pad(adj, ((0, 0), (0, Np - N), (0, Np - N))).astype(compute_dtype)

    add_bias_in_kernel = pre_apply and (bias is not None)

    # Triple-buffer the adjacency tile when per-step MXU work is short.
    steps_per_batch = (Np // tr) * (Np // tk)
    adj_bufs = 3 if (steps_per_batch >= 4 and Cp <= 512
                     and _ws_bytes(tr, tk, Cp, xb, ab, 3) <= budget) else 2
    if adj_bufs > 2:
        try:
            adj_spec = pl.BlockSpec((1, tr, tk), lambda b, i, k: (b, i, k),
                                    pipeline_mode=pl.Buffered(adj_bufs))
        except TypeError:  # older jax without pipeline_mode kwarg
            adj_spec = pl.BlockSpec((1, tr, tk), lambda b, i, k: (b, i, k))
    else:
        adj_spec = pl.BlockSpec((1, tr, tk), lambda b, i, k: (b, i, k))

    in_specs = [
        # When tk == Np this index is (b, 0, 0): slab is DMA'd once per batch.
        pl.BlockSpec((1, tk, Cp), lambda b, i, k: (b, k, 0)),
        adj_spec,
    ]
    inputs = [slab, adj_c]
    if add_bias_in_kernel:
        bias_row = jnp.pad(jnp.tile(bias.astype(jnp.float32), S),
                           (0, Cp - C)).reshape(1, Cp)
        in_specs.append(pl.BlockSpec((1, Cp), lambda b, i, k: (0, 0)))
        inputs.append(bias_row)

    flops = 2 * B * Np * Np * Cp
    bytes_accessed = (slab.size * xb + adj_c.size * ab + B * Np * Cp * 4
                      + (Cp * 4 if add_bias_in_kernel else 0))

    out = pl.pallas_call(
        functools.partial(_agg_kernel, add_bias=add_bias_in_kernel),
        out_shape=jax.ShapeDtypeStruct((B, Np, Cp), jnp.float32),
        grid_spec=pltpu.PrefetchScalarGridSpec(
            num_scalar_prefetch=0,
            grid=(B, Np // tr, Np // tk),
            in_specs=in_specs,
            out_specs=pl.BlockSpec((1, tr, Cp), lambda b, i, k: (b, i, 0)),
        ),
        compiler_params=pltpu.CompilerParams(
            dimension_semantics=("parallel", "parallel", "arbitrary"),
            vmem_limit_bytes=vmem_limit,
        ),
        cost_estimate=pl.CostEstimate(flops=int(flops), transcendentals=0,
                                      bytes_accessed=int(bytes_accessed)),
    )(*inputs)

    out = out[:, :N, :C]                               # strip padding
    if pre_apply:
        y = out.reshape(B, N, S, F_out)
    else:
        y = jnp.einsum("bnsf,fo->bnso", out.reshape(B, N, S, F_in), weight)
        if bias is not None:
            y = y + bias
    return y.astype(out_dtype)


def dense_graph_conv_ref(x, adj, weight, bias=None):
    # Pure-JAX reference matching the PyTorch forward exactly (f32).
    B, S, N, F_in = x.shape
    F_out = weight.shape[-1]
    xw = jnp.einsum("bsnf,fo->bsno", x, weight)          # linear (no bias)
    xr = jnp.transpose(xw, (0, 2, 1, 3)).reshape(B, N, S * F_out)
    ax = jnp.matmul(adj, xr).reshape(B, N, S, F_out)
    if bias is not None:
        ax = ax + bias
    return ax


if __name__ == "__main__":
    key = jax.random.PRNGKey(0)

    def run_case(idx, B, S, N, F_in, F_out, zero_bias, compute_dtype, **tile_kw):
        kx, ka, kw, kb = jax.random.split(jax.random.fold_in(key, idx), 4)
        x = jax.random.normal(kx, (B, S, N, F_in), dtype=jnp.float32)
        adj = jax.random.uniform(ka, (B, N, N), dtype=jnp.float32)
        # nn.Linear-style init: uniform(-1/sqrt(fan_in), 1/sqrt(fan_in)).
        bound = 1.0 / jnp.sqrt(jnp.float32(F_in))
        weight = jax.random.uniform(kw, (F_in, F_out), jnp.float32, -bound, bound)
        bias = (jnp.zeros((F_out,), jnp.float32) if zero_bias
                else jax.random.normal(kb, (F_out,), dtype=jnp.float32))

        out = jax.block_until_ready(
            dense_graph_conv(x, adj, weight, bias,
                             compute_dtype=compute_dtype, **tile_kw))
        ref = dense_graph_conv_ref(x, adj, weight, bias)
        assert out.shape == (B, N, S, F_out), (idx, out.shape)
        err = float(jnp.max(jnp.abs(out - ref)))
        scale = float(jnp.maximum(1.0, jnp.max(jnp.abs(ref))))
        # bf16 MXU feeds (f32 accumulation) need a relaxed tolerance.
        tol = (1e-4 if compute_dtype == jnp.float32 else 5e-2) * scale
        assert err <= tol, f"case {idx}: err={err} tol={tol}"

    # Case 0: exact f32 path, F_out > F_in -> aggregate in kernel, W applied after.
    run_case(0, B=2, S=4, N=8, F_in=16, F_out=32, zero_bias=True,
             compute_dtype=jnp.float32)
    # Case 1: exact f32 path, F_in > F_out -> W hoisted before kernel, bias in-kernel.
    run_case(1, B=2, S=4, N=8, F_in=32, F_out=16, zero_bias=False,
             compute_dtype=jnp.float32)
    # Case 2: bf16 MXU path, tiled contraction (multi-k accumulation into out_ref,
    #         triple-buffered adjacency tiles).
    run_case(2, B=1, S=2, N=256, F_in=8, F_out=16, zero_bias=False,
             compute_dtype=jnp.bfloat16, row_tile=128, k_tile=128)
    # Case 3: bf16 default path, auto tiles (tk=N so slab streams once per batch).
    run_case(3, B=2, S=4, N=128, F_in=32, F_out=16, zero_bias=False,
             compute_dtype=jnp.bfloat16)

    print("KERNEL_OK")
</pallas_src>

<mosaic_0001>
module attributes {stable_mosaic.version = 11 : i64} {
  func.func @_agg_kernel(%arg0: i32, %arg1: i32, %arg2: i32, %arg3: memref<1x8x128xf32, #tpu.memory_space<vmem>>, %arg4: memref<1x8x8xf32, #tpu.memory_space<vmem>>, %arg5: memref<1x8x128xf32, #tpu.memory_space<vmem>>) attributes {dimension_semantics = [#tpu.dimension_semantics<parallel>, #tpu.dimension_semantics<parallel>, #tpu.dimension_semantics<arbitrary>], iteration_bounds = array<i64: 2, 1, 1>, scalar_prefetch = 0 : i64, scratch_operands = 0 : i64, tpu.core_type = #tpu.core_type<tc>, window_params = [{transform_indices = @transform_0, window_bounds = array<i64: 1, 8, 128>}, {transform_indices = @transform_1, window_bounds = array<i64: 1, 8, 8>}, {transform_indices = @transform_2, window_bounds = array<i64: 1, 8, 128>}]} {
    %c0 = arith.constant 0 : index
    %c0_0 = arith.constant 0 : index
    %c0_1 = arith.constant 0 : index
    %0 = vector.load %arg4[%c0, %c0_0, %c0_1] : memref<1x8x8xf32, #tpu.memory_space<vmem>>, vector<1x8x8xf32>
    %1 = vector.shape_cast %0 : vector<1x8x8xf32> to vector<8x8xf32>
    %c0_2 = arith.constant 0 : index
    %c0_3 = arith.constant 0 : index
    %c0_4 = arith.constant 0 : index
    %2 = vector.load %arg3[%c0_2, %c0_3, %c0_4] : memref<1x8x128xf32, #tpu.memory_space<vmem>>, vector<1x8x128xf32>
    %3 = vector.shape_cast %2 : vector<1x8x128xf32> to vector<8x128xf32>
    %cst = arith.constant dense<0.000000e+00> : vector<8x128xf32>
    %4 = tpu.matmul %1, %3, %cst {dimension_numbers = #tpu.dot_dimension_numbers<[1], [0], [0], [1], [0, 0, 1, 1], [], []>} : vector<8x8xf32>, vector<8x128xf32>, vector<8x128xf32> -> vector<8x128xf32>
    %c0_i32 = arith.constant 0 : i32
    %5 = arith.cmpi eq, %arg2, %c0_i32 : i32
    %6 = arith.extui %5 : i1 to i32
    %c0_i32_5 = arith.constant 0 : i32
    %7 = arith.cmpi ne, %6, %c0_i32_5 : i32
    scf.if %7 {
      %c0_8 = arith.constant 0 : index
      %c0_9 = arith.constant 0 : index
      %c0_10 = arith.constant 0 : index
      %11 = vector.load %arg5[%c0_8, %c0_9, %c0_10] : memref<1x8x128xf32, #tpu.memory_space<vmem>>, vector<1x8x128xf32>
      %12 = vector.shape_cast %11 : vector<1x8x128xf32> to vector<8x128xf32>
      %13 = vector.shape_cast %4 : vector<8x128xf32> to vector<1x8x128xf32>
      tpu.vector_store %arg5[%c0_8, %c0_9, %c0_10], %13 {strides = array<i32>} : memref<1x8x128xf32, #tpu.memory_space<vmem>>, vector<1x8x128xf32>,
    } else {
    }
    %c0_i32_6 = arith.constant 0 : i32
    %8 = arith.cmpi sgt, %arg2, %c0_i32_6 : i32
    %9 = arith.extui %8 : i1 to i32
    %c0_i32_7 = arith.constant 0 : i32
    %10 = arith.cmpi ne, %9, %c0_i32_7 : i32
    scf.if %10 {
      %c0_8 = arith.constant 0 : index
      %c0_9 = arith.constant 0 : index
      %c0_10 = arith.constant 0 : index
      %11 = vector.load %arg5[%c0_8, %c0_9, %c0_10] : memref<1x8x128xf32, #tpu.memory_space<vmem>>, vector<1x8x128xf32>
      %12 = vector.shape_cast %11 : vector<1x8x128xf32> to vector<8x128xf32>
      %13 = arith.addf %12, %4 : vector<8x128xf32>
      %c0_11 = arith.constant 0 : index
      %c0_12 = arith.constant 0 : index
      %c0_13 = arith.constant 0 : index
      %14 = vector.load %arg5[%c0_11, %c0_12, %c0_13] : memref<1x8x128xf32, #tpu.memory_space<vmem>>, vector<1x8x128xf32>
      %15 = vector.shape_cast %14 : vector<1x8x128xf32> to vector<8x128xf32>
      %16 = vector.shape_cast %13 : vector<8x128xf32> to vector<1x8x128xf32>
      tpu.vector_store %arg5[%c0_11, %c0_12, %c0_13], %16 {strides = array<i32>} : memref<1x8x128xf32, #tpu.memory_space<vmem>>, vector<1x8x128xf32>,
    } else {
    }
    return
  }
  func.func @transform_0(%arg0: i32, %arg1: i32, %arg2: i32) -> (i32, i32, i32) {
    %c0_i32 = arith.constant 0 : i32
    %c0_i32_0 = arith.constant 0 : i32
    return %arg0, %arg2, %c0_i32 : i32, i32, i32
  }
  func.func @transform_1(%arg0: i32, %arg1: i32, %arg2: i32) -> (i32, i32, i32) {
    %c0_i32 = arith.constant 0 : i32
    return %arg0, %arg1, %arg2 : i32, i32, i32
  }
  func.func @transform_2(%arg0: i32, %arg1: i32, %arg2: i32) -> (i32, i32, i32) {
    %c0_i32 = arith.constant 0 : i32
    %c0_i32_0 = arith.constant 0 : i32
    return %arg0, %arg1, %c0_i32 : i32, i32, i32
  }
}

</mosaic_0001>

<llo_original>
// kernel: tpu_custom_call.1
$region0: #{tpu_custom_call.1}
  #allocation0 [shape = 'u32[]', space=smem, size = 0x4, offset = 0x4, fixed_abs, tag = 'smem constant byte address 0x4 - core index']
  #allocation1 [shape = 'u32[144,128]{1,0:T(1,128)}', space=vmem, size = 0x12000, scoped, tag = 'internal scratch']
  %s0 = inlined_call_operand.hbm [shape: f32[2,8,128], index: 0, kind: input, shape index: {}]
  %s1 = inlined_call_operand.hbm [shape: f32[2,8,8], index: 1, kind: input, shape index: {}]
  %s2 = inlined_call_operand.hbm [shape: f32[2,8,128], index: 2, kind: output, shape index: {}]
  %s3 = sld [smem:[#allocation0]]
  $region57: #{tpu_custom_call.1} parent=0
    _
  %s5 = ssub.s32 1, %s3
  %s6 = scalar_select 0, %s5, %s3
  $region1: #{tpu_custom_call.1} parent=0
    #allocation2 [shape = 'u8[8192]{0}', space=vmem, size = 0x2000, scoped, tag = 'input window, operand 0']
    #allocation3 [shape = 's32[2]{0}', space=sflag, size = 0x8, scoped, tag = 'scoped memory for tpu_custom_call.1']
    #allocation4 [shape = 's32[2]{0}', space=sflag, size = 0x8, scoped, tag = 'scoped memory for tpu_custom_call.1']
    #allocation5 [shape = 'u8[8192]{0}', space=vmem, size = 0x2000, scoped, tag = 'input window, operand 1']
    #allocation6 [shape = 's32[2]{0}', space=sflag, size = 0x8, scoped, tag = 'scoped memory for tpu_custom_call.1']
    #allocation7 [shape = 'u8[8192]{0}', space=vmem, size = 0x2000, scoped, tag = 'output window, operand 0']
    %7 = vsyncpa [#allocation3], 0
    %s8 = scalar_lea.sflag [#allocation3], 1
    %9 = vsyncpa %s8, 0
    %10 = vsyncpa [#allocation6], 0
    %s11 = scalar_lea.sflag [#allocation6], 1
    %12 = vsyncpa %s11, 0
    %13 = vsyncpa [#allocation4], 0
    %s14 = scalar_lea.sflag [#allocation4], 1
    %15 = vsyncpa %s14, 0
    loop: start=0, step=1, limit=4
    $region2: #{tpu_custom_call.1} parent=1 // loop_pre_header
      _
    $region3: #{tpu_custom_call.1} parent=1 // loop_header
      %s17 = sphi 0, %s21
      %p18 = scmp.ge.s32.totalorder %s17, 4
      %s24 = sphi 0, %s43
      %s25 = sphi 0, %s39
      %s26 = sphi 0, %s35
      %s27 = sphi 0, %s24
      %s28 = sphi 0, %s25
      %s29 = sphi 0, %s26
      %s30 = sphi 0, %s27
      %s31 = sphi 0, %s28
      %s32 = sphi 0, %s29
      %s48 = sphi 0, %s50
      %s51 = sphi 0, %s48
      %s52 = sphi 0, %s51
      %s68 = sphi 0, %s52
      %s78 = sphi 0, %s80
      %s81 = sphi 0, %s78
      %s82 = sphi 0, %s81
      %s98 = sphi 0, %s82
      %s106 = sphi 0, %s108
      %s109 = sphi 0, %s106
      %s110 = sphi 0, %s109
      %s126 = sphi 0, %s110
    $region4: #{tpu_custom_call.1} parent=1 // loop_header_branch
      %20 = sbr.rel (%p18) target = $region8
    $region5: #{tpu_custom_call.1} parent=1 // loop_body
      %s22 = ssub.s32 %s17, 1
      %s23 = ssub.s32 %s17, 2
      %s33 = sadd.s32 1, %s26
      %p34 = scmp.ge.s32.totalorder %s33, 1
      %s35 = scalar_select %p34, 0, %s33
      %s36 = sadd.s32 1, %s25
      %s37 = scalar_select %p34, %s36, %s25
      %p38 = scmp.ge.s32.totalorder %s37, 1
      %s39 = scalar_select %p38, 0, %s37
      %s40 = sadd.s32 1, %s24
      %s41 = scalar_select %p38, %s40, %s24
      %p42 = scmp.ge.s32.totalorder %s41, 2
      %s43 = scalar_select %p42, 0, %s41
      %s44 = ssub.s32 %s24, %s43
      %s45 = ssub.s32 %s26, %s35
      %s46 = sor.u32 %s44, %s45
      %p47 = scmp.eq.s32.totalorder %s46, 0
      %s49 = sadd.s32 %s48, 1
      %s50 = scalar_select %p47, %s48, %s49
      %p53 = pneg %p47
      %p54 = scmp.eq.s32.totalorder %s17, 1
      %p55 = por %p53, %p54
      %p56 = scmp.ne.s32.totalorder %s48, %s51
      %p57 = scmp.eq.s32.totalorder %s17, 0
      %p58 = por %p56, %p57
      %p59 = scmp.ne.s32.totalorder %s48, %s51
      %p60 = scmp.eq.s32.totalorder %s22, 1
      %p61 = por %p59, %p60
      %p62 = scmp.ne.s32.totalorder %s51, %s52
      %p63 = scmp.eq.s32.totalorder %s22, 0
      %p64 = por %p62, %p63
      %p65 = scmp.ne.s32.totalorder %s51, %s52
      %p66 = scmp.eq.s32.totalorder %s23, 1
      %p67 = por %p65, %p66
      %p69 = scmp.ne.s32.totalorder %s52, %s68
      %p70 = scmp.eq.s32.totalorder %s23, 0
      %p71 = por %p69, %p70
      %s72 = ssub.s32 %s24, %s43
      %s73 = ssub.s32 %s25, %s39
      %s74 = sor.u32 %s72, %s73
      %s75 = ssub.s32 %s26, %s35
      %s76 = sor.u32 %s74, %s75
      %p77 = scmp.eq.s32.totalorder %s76, 0
      %s79 = sadd.s32 %s78, 1
      %s80 = scalar_select %p77, %s78, %s79
      %p83 = pneg %p77
      %p84 = scmp.eq.s32.totalorder %s17, 1
      %p85 = por %p83, %p84
      %p86 = scmp.ne.s32.totalorder %s78, %s81
      %p87 = scmp.eq.s32.totalorder %s17, 0
      %p88 = por %p86, %p87
      %p89 = scmp.ne.s32.totalorder %s78, %s81
      %p90 = scmp.eq.s32.totalorder %s22, 1
      %p91 = por %p89, %p90
      %p92 = scmp.ne.s32.totalorder %s81, %s82
      %p93 = scmp.eq.s32.totalorder %s22, 0
      %p94 = por %p92, %p93
      %p95 = scmp.ne.s32.totalorder %s81, %s82
      %p96 = scmp.eq.s32.totalorder %s23, 1
      %p97 = por %p95, %p96
      %p99 = scmp.ne.s32.totalorder %s82, %s98
      %p100 = scmp.eq.s32.totalorder %s23, 0
      %p101 = por %p99, %p100
      %s102 = ssub.s32 %s24, %s43
      %s103 = ssub.s32 %s25, %s39
      %s104 = sor.u32 %s102, %s103
      %p105 = scmp.eq.s32.totalorder %s104, 0
      %s107 = sadd.s32 %s106, 1
      %s108 = scalar_select %p105, %s106, %s107
      %p111 = pneg %p105
      %p112 = scmp.eq.s32.totalorder %s17, 1
      %p113 = por %p111, %p112
      %p114 = scmp.ne.s32.totalorder %s106, %s109
      %p115 = scmp.eq.s32.totalorder %s17, 0
      %p116 = por %p114, %p115
      %p117 = scmp.ne.s32.totalorder %s106, %s109
      %p118 = scmp.eq.s32.totalorder %s22, 1
      %p119 = por %p117, %p118
      %p120 = scmp.ne.s32.totalorder %s109, %s110
      %p121 = scmp.eq.s32.totalorder %s22, 0
      %p122 = por %p120, %p121
      %p123 = scmp.ne.s32.totalorder %s109, %s110
      %p124 = scmp.eq.s32.totalorder %s23, 1
      %p125 = por %p123, %p124
      %p127 = scmp.ne.s32.totalorder %s110, %s126
      %p128 = scmp.eq.s32.totalorder %s23, 0
      %p129 = por %p127, %p128
      %p130 = scmp.le.s32.totalorder 1, %s17
      %p131 = scmp.lt.s32.totalorder %s17, 3
      %p132 = pnand %p130, %p131
      %p133 = pneg %p132
      // Predicated region
      $region9: #{tpu_custom_call.1} parent=5 // pred_check
        _
      $region10: #{tpu_custom_call.1} parent=5 // pred_check_branch
        %135 = sbr.rel (%p132) target = $region12
      $region11: #{tpu_custom_call.1} parent=5 // pred_region
        %s136 = ssub.s32 %s17, 1
      $region12: #{tpu_custom_call.1} parent=5 // pred_fallthru
        _
      %p137 = scmp.lt.s32.totalorder %s17, 2
      // Predicated region
      $region13: #{tpu_custom_call.1} parent=5 // pred_check
        %p138 = pneg %p137
      $region14: #{tpu_custom_call.1} parent=5 // pred_check_branch
        %140 = sbr.rel (%p138) target = $region16
      $region15: #{tpu_custom_call.1} parent=5 // pred_region
        // Predicated region
        $region17: #{tpu_custom_call.1} parent=15 // pred_check
          %p141 = pneg %p58
        $region18: #{tpu_custom_call.1} parent=15 // pred_check_branch
          %143 = sbr.rel (%p141) target = $region20
        $region19: #{tpu_custom_call.1} parent=15 // pred_region
          %s144 = sand.u32 %s48, 1
          %s145 = scalar_lea.sflag [#allocation3], %s144
          %s146 = sand.u32 %s48, 1
          %s147 = smul.addr %s146, 8
          %s148 = scalar_lea.vmem [#allocation2], %s147
          %s150 = ssub.s32 128, 128
          %151 = vsyncadd %s145, %s150
          %s152 = sadd.s32 %s26, %s24
          %s153 = smul.addr %s152, 128
          %s154 = scalar_lea.hbm %s0, %s153
          %s156 = sshll.u32 %s148, 4
          %s157 = int_to_ptr.vmem [resolvable:$true] %s156
          %159 = dma.hbm_to_vmem [thread:$0]  %s154, 128, %s157, %s145
        $region20: #{tpu_custom_call.1} parent=15 // pred_fallthru
          _
        // Predicated region
        $region21: #{tpu_custom_call.1} parent=15 // pred_check
          %p160 = pneg %p88
        $region22: #{tpu_custom_call.1} parent=15 // pred_check_branch
          %162 = sbr.rel (%p160) target = $region24
        $region23: #{tpu_custom_call.1} parent=15 // pred_region
          %s163 = sand.u32 %s78, 1
          %s164 = scalar_lea.sflag [#allocation6], %s163
          %s165 = sand.u32 %s78, 1
          %s166 = smul.addr %s165, 8
          %s167 = scalar_lea.vmem [#allocation5], %s166
          %s169 = ssub.s32 128, 128
          %170 = vsyncadd %s164, %s169
          %s171 = sadd.s32 %s26, %s25
          %s172 = sadd.s32 %s171, %s24
          %s173 = smul.addr %s172, 128
          %s174 = scalar_lea.hbm %s1, %s173
          %s176 = sshll.u32 %s167, 4
          %s177 = int_to_ptr.vmem [resolvable:$true] %s176
          %179 = dma.hbm_to_vmem [thread:$0]  %s174, 128, %s177, %s164
        $region24: #{tpu_custom_call.1} parent=15 // pred_fallthru
          _
      $region16: #{tpu_custom_call.1} parent=5 // pred_fallthru
        _
      %p180 = scmp.le.s32.totalorder 1, %s17
      %p181 = scmp.lt.s32.totalorder %s17, 3
      %p182 = pnand %p180, %p181
      %p183 = pneg %p182
      // Predicated region
      $region25: #{tpu_custom_call.1} parent=5 // pred_check
        _
      $region26: #{tpu_custom_call.1} parent=5 // pred_check_branch
        %185 = sbr.rel (%p182) target = $region28
      $region27: #{tpu_custom_call.1} parent=5 // pred_region
        %s186 = ssub.s32 %s17, 1
        %s187 = sand.u32 %s51, 1
        %s188 = scalar_lea.sflag [#allocation3], %s187
        %s189 = sand.u32 %s51, 1
        %s190 = smul.addr %s189, 8
        %s191 = scalar_lea.vmem [#allocation2], %s190
        // Predicated region
        $region29: #{tpu_custom_call.1} parent=27 // pred_check
          %p192 = pneg %p64
        $region30: #{tpu_custom_call.1} parent=27 // pred_check_branch
          %194 = sbr.rel (%p192) target = $region32
        $region31: #{tpu_custom_call.1} parent=27 // pred_region
          %195 = dma.done %s188, 128
        $region32: #{tpu_custom_call.1} parent=27 // pred_fallthru
          _
        %s196 = sand.u32 %s81, 1
        %s197 = scalar_lea.sflag [#allocation6], %s196
        %s198 = sand.u32 %s81, 1
        %s199 = smul.addr %s198, 8
        %s200 = scalar_lea.vmem [#allocation5], %s199
        // Predicated region
        $region33: #{tpu_custom_call.1} parent=27 // pred_check
          %p201 = pneg %p94
        $region34: #{tpu_custom_call.1} parent=27 // pred_check_branch
          %203 = sbr.rel (%p201) target = $region36
        $region35: #{tpu_custom_call.1} parent=27 // pred_region
          %204 = dma.done %s197, 128
        $region36: #{tpu_custom_call.1} parent=27 // pred_fallthru
          _
        %s205 = sand.u32 %s51, 1
        %s206 = scalar_lea.sflag [#allocation3], %s205
        %s207 = sand.u32 %s51, 1
        %s208 = smul.addr %s207, 8
        %s209 = scalar_lea.vmem [#allocation2], %s208
        %p210 = pneg %p64
        %p211 = pneg %p61
        %s212 = sand.u32 %s81, 1
        %s213 = scalar_lea.sflag [#allocation6], %s212
        %s214 = sand.u32 %s81, 1
        %s215 = smul.addr %s214, 8
        %s216 = scalar_lea.vmem [#allocation5], %s215
        %p217 = pneg %p94
        %p218 = pneg %p91
        %p219 = pneg %p122
        %p220 = pneg %p119
        %s221 = sand.u32 %s109, 1
        %s222 = scalar_lea.sflag [#allocation4], %s221
        %s223 = sand.u32 %s109, 1
        %s224 = smul.addr %s223, 8
        %s225 = scalar_lea.vmem [#allocation7], %s224
        %v226 = vld [vmem:[%s200] sm:$0xff]
        %v227 = vld [vmem:[%s191] sm:$0xff]
        %vm228 = vcmask 64512
        %v230 = vsel %vm228, %v226, 0
        %232 = vmatprep.subr.mxu0 0.0
        %233 = vmatpush1.msra.mxu0 0.0
        %234 = vmatprep.subr.mxu0 0.0
        %235 = vmatpush1.msra.mxu0 0.0
        %236 = vmatprep.subr.mxu0 0.0
        %237 = vmatpush1.msra.mxu0 0.0
        %238 = vmatprep.subr.mxu0 0.0
        %239 = vmatpush1.msra.mxu0 0.0
        %240 = vmatprep.subr.mxu0 0.0
        %241 = vmatpush1.msra.mxu0 0.0
        %242 = vmatprep.subr.mxu0 0.0
        %243 = vmatpush1.msra.mxu0 0.0
        %244 = vmatprep.subr.mxu0 0.0
        %245 = vmatpush1.msra.mxu0 0.0
        %246 = vmatprep.subr.mxu0 0.0
        %247 = vmatpush1.msra.mxu0 0.0
        %248 = vmatprep.subr.mxu0 0.0
        %249 = vmatpush1.msra.mxu0 0.0
        %250 = vmatprep.subr.mxu0 0.0
        %251 = vmatpush1.msra.mxu0 0.0
        %252 = vmatprep.subr.mxu0 0.0
        %253 = vmatpush1.msra.mxu0 0.0
        %254 = vmatprep.subr.mxu0 0.0
        %255 = vmatpush1.msra.mxu0 0.0
        %256 = vmatprep.subr.mxu0 0.0
        %257 = vmatpush1.msra.mxu0 0.0
        %258 = vmatprep.subr.mxu0 0.0
        %259 = vmatpush1.msra.mxu0 0.0
        %260 = vmatprep.subr.mxu0 0.0
        %261 = vmatpush1.msra.mxu0 0.0
        %262 = vmatprep.subr.mxu0 0.0
        %263 = vmatpush1.msra.mxu0 %v227
        %264 = vmatprep.subr.mxu0 0.0
        %265 = vmatpush2.msra.mxu0 0.0
        %266 = vmatprep.subr.mxu0 0.0
        %267 = vmatpush2.msra.mxu0 0.0
        %268 = vmatprep.subr.mxu0 0.0
        %269 = vmatpush2.msra.mxu0 0.0
        %270 = vmatprep.subr.mxu0 0.0
        %271 = vmatpush2.msra.mxu0 0.0
        %272 = vmatprep.subr.mxu0 0.0
        %273 = vmatpush2.msra.mxu0 0.0
        %274 = vmatprep.subr.mxu0 0.0
        %275 = vmatpush2.msra.mxu0 0.0
        %276 = vmatprep.subr.mxu0 0.0
        %277 = vmatpush2.msra.mxu0 0.0
        %278 = vmatprep.subr.mxu0 0.0
        %279 = vmatpush2.msra.mxu0 0.0
        %280 = vmatprep.subr.mxu0 0.0
        %281 = vmatpush2.msra.mxu0 0.0
        %282 = vmatprep.subr.mxu0 0.0
        %283 = vmatpush2.msra.mxu0 0.0
        %284 = vmatprep.subr.mxu0 0.0
        %285 = vmatpush2.msra.mxu0 0.0
        %286 = vmatprep.subr.mxu0 0.0
        %287 = vmatpush2.msra.mxu0 0.0
        %288 = vmatprep.subr.mxu0 0.0
        %289 = vmatpush2.msra.mxu0 0.0
        %290 = vmatprep.subr.mxu0 0.0
        %291 = vmatpush2.msra.mxu0 0.0
        %292 = vmatprep.subr.mxu0 0.0
        %293 = vmatpush2.msra.mxu0 0.0
        %294 = vmatprep.subr.mxu0 0.0
        %295 = vmatpush2.msra.mxu0 0.0
        %296 = vmatprep.mubr.f32.mxu0 0.0
        %297 = vmatmul.mubr.f32.gmra.mxu0 %v230
        %v298 = vpop.f32.mrf.mxu0
        %v299 = vadd.f32 0.0, %v298
        %v300 = vpop.f32.mrf.mxu0
        %301 = vdwg.mxu0
        %p302 = scmp.eq.s32.totalorder %s29, 0
        // Predicated region
        $region37: #{tpu_custom_call.1} parent=27 // pred_check
          %p303 = pneg %p302
        $region38: #{tpu_custom_call.1} parent=27 // pred_check_branch
          %305 = sbr.rel (%p303) target = $region40
        $region39: #{tpu_custom_call.1} parent=27 // pred_region
          %306 = vst [vmem:[%s225] sm:$0xff] %v299
        $region40: #{tpu_custom_call.1} parent=27 // pred_fallthru
          _
        %p307 = scmp.gt.s32.totalorder %s29, 0
        // Predicated region
        $region41: #{tpu_custom_call.1} parent=27 // pred_check
          %p308 = pneg %p307
        $region42: #{tpu_custom_call.1} parent=27 // pred_check_branch
          %310 = sbr.rel (%p308) target = $region44
        $region43: #{tpu_custom_call.1} parent=27 // pred_region
          %v311 = vld [vmem:[%s225] sm:$0xff]
          %v312 = vadd.f32 %v311, %v299
          %313 = vst [vmem:[%s225] sm:$0xff] %v312
        $region44: #{tpu_custom_call.1} parent=27 // pred_fallthru
          _
        %s314 = sand.u32 %s109, 1
        %s315 = scalar_lea.sflag [#allocation4], %s314
        %s316 = sand.u32 %s109, 1
        %s317 = smul.addr %s316, 8
        %s318 = scalar_lea.vmem [#allocation7], %s317
        // Predicated region
        $region45: #{tpu_custom_call.1} parent=27 // pred_check
          %p319 = pneg %p119
        $region46: #{tpu_custom_call.1} parent=27 // pred_check_branch
          %321 = sbr.rel (%p319) target = $region48
        $region47: #{tpu_custom_call.1} parent=27 // pred_region
          %s323 = ssub.s32 128, 128
          %324 = vsyncadd %s315, %s323
          %s325 = sadd.s32 %s28, %s27
          %s326 = smul.addr %s325, 128
          %s327 = scalar_lea.hbm %s2, %s326
          %s329 = sshll.u32 %s318, 4
          %s330 = int_to_ptr.vmem [resolvable:$true] %s329
          %332 = dma.vmem_to_hbm [thread:$0]  %s330, 128, %s327, %s315
        $region48: #{tpu_custom_call.1} parent=27 // pred_fallthru
          _
      $region28: #{tpu_custom_call.1} parent=5 // pred_fallthru
        _
      %p333 = scmp.le.s32.totalorder 2, %s17
      // Predicated region
      $region49: #{tpu_custom_call.1} parent=5 // pred_check
        %p334 = pneg %p333
      $region50: #{tpu_custom_call.1} parent=5 // pred_check_branch
        %336 = sbr.rel (%p334) target = $region52
      $region51: #{tpu_custom_call.1} parent=5 // pred_region
        %s337 = ssub.s32 %s17, 2
        // Predicated region
        $region53: #{tpu_custom_call.1} parent=51 // pred_check
          %p338 = pneg %p125
        $region54: #{tpu_custom_call.1} parent=51 // pred_check_branch
          %340 = sbr.rel (%p338) target = $region56
        $region55: #{tpu_custom_call.1} parent=51 // pred_region
          %s341 = sand.u32 %s110, 1
          %s342 = scalar_lea.sflag [#allocation4], %s341
          %s343 = sand.u32 %s110, 1
          %s344 = smul.addr %s343, 8
          %s345 = scalar_lea.vmem [#allocation7], %s344
          %346 = dma.done %s342, 128
        $region56: #{tpu_custom_call.1} parent=51 // pred_fallthru
          _
      $region52: #{tpu_custom_call.1} parent=5 // pred_fallthru
        _
    $region6: #{tpu_custom_call.1} parent=1 // loop_footer
      %s21 = sadd.s32 1, %s17
    $region7: #{tpu_custom_call.1} parent=1 // loop_footer_branch
      %16 = sbr.rel target = $region3
    $region8: #{tpu_custom_call.1} parent=1 // loop_exit
      _
    %347 = vsyncpa [#allocation3], 1
    %s348 = scalar_lea.sflag [#allocation3], 1
    %349 = vsyncpa %s348, 1
    %350 = vsyncpa [#allocation6], 1
    %s351 = scalar_lea.sflag [#allocation6], 1
    %352 = vsyncpa %s351, 1
    %353 = vsyncpa [#allocation4], 1
    %s354 = scalar_lea.sflag [#allocation4], 1
    %355 = vsyncpa %s354, 1

</llo_original>
